<compile_context>
chip_gen: v7x
topology: tpu7x:2x2x1
jax: 0.10.0
libtpu: 0.0.40
codegen_flags: <defaults>
</compile_context>

<pallas_src>
import functools

import jax
import jax.numpy as jnp
from jax.experimental import pallas as pl
from jax.experimental.pallas import tpu as pltpu

LANE = 128
SUB = 8
MAX_TR = 256      # rows per block (batch*channel rows)
MAX_TCOL = 2048   # columns per block (spatial elements)


def _round_up(a, b):
    return (a + b - 1) // b * b


def _bce_sum_kernel(x_ref, y_ref, w_ref, pw_ref, out_ref, acc_ref, *,
                    n_cols, tcol, need_col_mask, col_split_stride):
    """Accumulates per-core sum of BCE-with-logits loss over (row, col) tiles."""
    i = pl.program_id(1)   # row-tile index within this core's share
    j = pl.program_id(2)   # col-tile index within this core's share

    @pl.when((i == 0) & (j == 0))
    def _():
        acc_ref[...] = jnp.zeros_like(acc_ref)

    x = x_ref[...].astype(jnp.float32)           # (TR, TCOL)
    y = y_ref[...].astype(jnp.float32)           # (TR, TCOL)
    w = w_ref[...]                               # (TR, 1)  per batch*channel row
    pw = pw_ref[...]                             # (TR, 1)

    # stable softplus(-x)
    sp = jnp.maximum(-x, 0.0) + jnp.log1p(jnp.exp(-jnp.abs(x)))
    loss = ((1.0 - y) * x + (pw * y + (1.0 - y)) * sp) * w

    if need_col_mask:
        # zero out padded columns (padded rows already have w == 0)
        col_tile = pl.program_id(0) * col_split_stride + j
        col = col_tile * tcol + jax.lax.broadcasted_iota(jnp.int32, loss.shape, 1)
        loss = jnp.where(col < n_cols, loss, 0.0)

    acc_ref[...] += loss

    @pl.when((i == pl.num_programs(1) - 1) & (j == pl.num_programs(2) - 1))
    def _():
        out_ref[0, 0] = jnp.sum(acc_ref[...])


@jax.jit
def bce_with_logits_loss(logits, labels, weight, pos_weight):
    """Mean BCE-with-logits loss. weight/pos_weight broadcastable over (B, C)."""
    shape = logits.shape
    assert len(shape) >= 2
    B, C = shape[0], shape[1]
    n = logits.size
    R = B * C
    HW = max(n // R, 1)

    # Per-(batch*channel) row weights -- tiny (R, 1) arrays, never materialized full-size.
    # TODO(synk): spatially-varying weight/pos_weight would need full-size HBM streams.
    def _per_row(p):
        p = jnp.asarray(p, jnp.float32)
        return jnp.broadcast_to(p, (B, C) + (1,) * (len(shape) - 2)).reshape(R, 1)

    w_row = _per_row(weight)
    pw_row = _per_row(pos_weight)

    # (B, C, *spatial) -> (B*C, prod(spatial)); row-major reshape, no copy.
    x = logits.reshape(R, HW)
    y = labels.reshape(R, HW)

    # --- tile sizing ---
    c_pad = _round_up(HW, LANE)
    tcol = min(c_pad, MAX_TCOL)
    c_pad = _round_up(c_pad, tcol)
    col_tiles = c_pad // tcol

    r_pad = _round_up(R, SUB)
    tr = min(r_pad, MAX_TR)
    r_pad = _round_up(r_pad, tr)
    row_tiles = r_pad // tr

    # Megacore (v7x): split across the two TensorCores along whichever tile axis is
    # already even, so no extra padding is introduced.  Sequential loop on v5e/v6e.
    split_rows = (row_tiles >= 2) and (row_tiles % 2 == 0)
    split_cols = (not split_rows) and (col_tiles >= 2) and (col_tiles % 2 == 0)
    ncores = 2 if (split_rows or split_cols) else 1
    rpc = row_tiles // (2 if split_rows else 1)   # row tiles per core
    cpc = col_tiles // (2 if split_cols else 1)   # col tiles per core

    # --- pad only if needed (demo shape needs none) ---
    if (r_pad, c_pad) != (R, HW):
        x = jnp.pad(x, ((0, r_pad - R), (0, c_pad - HW)))
        y = jnp.pad(y, ((0, r_pad - R), (0, c_pad - HW)))
    if r_pad != R:
        w_row = jnp.pad(w_row, ((0, r_pad - R), (0, 0)))   # padded rows -> weight 0
        pw_row = jnp.pad(pw_row, ((0, r_pad - R), (0, 0)))

    need_col_mask = c_pad != HW

    kernel = functools.partial(
        _bce_sum_kernel, n_cols=HW, tcol=tcol, need_col_mask=need_col_mask,
        col_split_stride=cpc if split_cols else 0)

    if split_rows:
        data_map = lambda p, i, j: (p * rpc + i, j)
        row_map = lambda p, i, j: (p * rpc + i, 0)
    elif split_cols:
        data_map = lambda p, i, j: (i, p * cpc + j)
        row_map = lambda p, i, j: (i, 0)
    else:
        data_map = lambda p, i, j: (i, j)
        row_map = lambda p, i, j: (i, 0)

    data_spec = pl.BlockSpec((tr, tcol), data_map)
    row_spec = pl.BlockSpec((tr, 1), row_map)

    partials = pl.pallas_call(
        kernel,
        out_shape=jax.ShapeDtypeStruct((ncores, 1), jnp.float32),
        grid_spec=pltpu.PrefetchScalarGridSpec(
            num_scalar_prefetch=0,
            grid=(ncores, rpc, cpc),
            in_specs=[data_spec, data_spec, row_spec, row_spec],
            out_specs=pl.BlockSpec((1, 1), lambda p, i, j: (p, 0),
                                   memory_space=pltpu.MemorySpace.SMEM),
            scratch_shapes=[pltpu.VMEM((tr, tcol), jnp.float32)],
        ),
        compiler_params=pltpu.CompilerParams(
            dimension_semantics=("parallel", "arbitrary", "arbitrary"),
            vmem_limit_bytes=32 * 1024 * 1024,
        ),
    )(x, y, w_row, pw_row)

    return jnp.sum(partials) / jnp.float32(n)


def bce_with_logits_loss_ref(logits, labels, weight, pos_weight):
    x = logits.astype(jnp.float32)
    y = labels.astype(jnp.float32)
    pw = jnp.broadcast_to(jnp.asarray(pos_weight, jnp.float32), x.shape)
    w = jnp.broadcast_to(jnp.asarray(weight, jnp.float32), x.shape)
    sp = jnp.maximum(-x, 0.0) + jnp.log1p(jnp.exp(-jnp.abs(x)))
    loss = ((1.0 - y) * x + (pw * y + (1.0 - y)) * sp) * w
    return jnp.mean(loss)


class BCEWithLogitsLossPallas:
    """Mirror of the PyTorch module; forward(logits, labels, masks) -> scalar."""

    def __init__(self, weight=None, pos_weight=None):
        self.weight = weight if weight is not None else jnp.float32(1.0)
        self.pos_weight = pos_weight if pos_weight is not None else jnp.float32(1.0)

    def forward(self, logits, labels, masks):
        # `masks` is intentionally unused, matching the reference module.
        del masks
        return bce_with_logits_loss(logits, labels, self.weight, self.pos_weight)


if __name__ == "__main__":
    key = jax.random.PRNGKey(0)
    k1, k2, k3 = jax.random.split(key, 3)

    B, C, H, W = 2, 4, 16, 16
    logits = jax.random.normal(k1, (B, C, H, W), jnp.float32) * 2.0
    labels = (jax.random.uniform(k2, (B, C, H, W)) > 0.5).astype(jnp.float32)
    masks = (jax.random.uniform(k3, (B, C, H, W)) > 0.3).astype(jnp.float32)

    # Optional per-channel weight / pos_weight (broadcastable, like the PyTorch module).
    weight = jnp.linspace(0.5, 1.5, C).reshape(1, C, 1, 1).astype(jnp.float32)
    pos_weight = jnp.linspace(1.0, 2.0, C).reshape(1, C, 1, 1).astype(jnp.float32)

    module = BCEWithLogitsLossPallas(weight=weight, pos_weight=pos_weight)
    loss = module.forward(logits, labels, masks)
    loss = jax.block_until_ready(loss)

    ref = bce_with_logits_loss_ref(logits, labels, weight, pos_weight)
    assert jnp.allclose(loss, ref, atol=1e-5, rtol=1e-5), (loss, ref)

    print("KERNEL_OK")
</pallas_src>

<mosaic_0001>
module attributes {stable_mosaic.version = 11 : i64} {
  func.func @_bce_sum_kernel(%arg0: i32, %arg1: i32, %arg2: i32, %arg3: memref<8x256xf32, #tpu.memory_space<vmem>>, %arg4: memref<8x256xf32, #tpu.memory_space<vmem>>, %arg5: memref<8x1xf32, #tpu.memory_space<vmem>>, %arg6: memref<8x1xf32, #tpu.memory_space<vmem>>, %arg7: memref<1x1xf32, #tpu.memory_space<smem>>, %arg8: memref<8x256xf32, #tpu.memory_space<vmem>>) attributes {dimension_semantics = [#tpu.dimension_semantics<parallel>, #tpu.dimension_semantics<arbitrary>, #tpu.dimension_semantics<arbitrary>], iteration_bounds = array<i64: 1, 1, 1>, scalar_prefetch = 0 : i64, scratch_operands = 1 : i64, tpu.core_type = #tpu.core_type<tc>, window_params = [{transform_indices = @transform_0, window_bounds = array<i64: 8, 256>}, {transform_indices = @transform_1, window_bounds = array<i64: 8, 256>}, {transform_indices = @transform_2, window_bounds = array<i64: 8, 1>}, {transform_indices = @transform_3, window_bounds = array<i64: 8, 1>}, {transform_indices = @transform_4, window_bounds = array<i64: 1, 1>}]} {
    %c0_i32 = arith.constant 0 : i32
    %0 = arith.cmpi eq, %arg1, %c0_i32 : i32
    %c0_i32_0 = arith.constant 0 : i32
    %1 = arith.cmpi eq, %arg2, %c0_i32_0 : i32
    %2 = arith.andi %0, %1 : i1
    %3 = arith.extui %2 : i1 to i32
    %c0_i32_1 = arith.constant 0 : i32
    %4 = arith.cmpi ne, %3, %c0_i32_1 : i32
    scf.if %4 {
      %cst_20 = arith.constant 0.000000e+00 : f32
      %39 = vector.broadcast %cst_20 : f32 to vector<8x256xf32>
      %c0_21 = arith.constant 0 : index
      %c0_22 = arith.constant 0 : index
      %40 = vector.load %arg8[%c0_21, %c0_22] : memref<8x256xf32, #tpu.memory_space<vmem>>, vector<8x256xf32>
      tpu.vector_store %arg8[%c0_21, %c0_22], %39 {strides = array<i32>} : memref<8x256xf32, #tpu.memory_space<vmem>>, vector<8x256xf32>,
    } else {
    }
    %c0 = arith.constant 0 : index
    %c0_2 = arith.constant 0 : index
    %5 = vector.load %arg3[%c0, %c0_2] : memref<8x256xf32, #tpu.memory_space<vmem>>, vector<8x256xf32>
    %c0_3 = arith.constant 0 : index
    %c0_4 = arith.constant 0 : index
    %6 = vector.load %arg4[%c0_3, %c0_4] : memref<8x256xf32, #tpu.memory_space<vmem>>, vector<8x256xf32>
    %c0_5 = arith.constant 0 : index
    %c0_6 = arith.constant 0 : index
    %7 = vector.load %arg5[%c0_5, %c0_6] : memref<8x1xf32, #tpu.memory_space<vmem>>, vector<8x1xf32>
    %c0_7 = arith.constant 0 : index
    %c0_8 = arith.constant 0 : index
    %8 = vector.load %arg6[%c0_7, %c0_8] : memref<8x1xf32, #tpu.memory_space<vmem>>, vector<8x1xf32>
    %cst = arith.constant 0.000000e+00 : f32
    %9 = vector.broadcast %cst : f32 to vector<8x256xf32>
    %10 = arith.subf %9, %5 : vector<8x256xf32>
    %cst_9 = arith.constant 0.000000e+00 : f32
    %11 = vector.broadcast %cst_9 : f32 to vector<8x256xf32>
    %12 = arith.maximumf %10, %11 : vector<8x256xf32>
    %13 = math.absf %5 : vector<8x256xf32>
    %cst_10 = arith.constant 0.000000e+00 : f32
    %14 = vector.broadcast %cst_10 : f32 to vector<8x256xf32>
    %15 = arith.subf %14, %13 : vector<8x256xf32>
    %16 = math.exp %15 : vector<8x256xf32>
    %17 = math.log1p %16 : vector<8x256xf32>
    %18 = arith.addf %12, %17 : vector<8x256xf32>
    %cst_11 = arith.constant 1.000000e+00 : f32
    %19 = vector.broadcast %cst_11 : f32 to vector<8x256xf32>
    %20 = arith.subf %19, %6 : vector<8x256xf32>
    %21 = arith.mulf %20, %5 : vector<8x256xf32>
    %22 = vector.broadcast %8 : vector<8x1xf32> to vector<8x256xf32>
    %23 = arith.mulf %22, %6 : vector<8x256xf32>
    %cst_12 = arith.constant 1.000000e+00 : f32
    %24 = vector.broadcast %cst_12 : f32 to vector<8x256xf32>
    %25 = arith.subf %24, %6 : vector<8x256xf32>
    %26 = arith.addf %23, %25 : vector<8x256xf32>
    %27 = arith.mulf %26, %18 : vector<8x256xf32>
    %28 = arith.addf %21, %27 : vector<8x256xf32>
    %29 = vector.broadcast %7 : vector<8x1xf32> to vector<8x256xf32>
    %30 = arith.mulf %28, %29 : vector<8x256xf32>
    %c0_13 = arith.constant 0 : index
    %c0_14 = arith.constant 0 : index
    %31 = vector.load %arg8[%c0_13, %c0_14] : memref<8x256xf32, #tpu.memory_space<vmem>>, vector<8x256xf32>
    %32 = arith.addf %31, %30 : vector<8x256xf32>
    %c0_15 = arith.constant 0 : index
    %c0_16 = arith.constant 0 : index
    %33 = vector.load %arg8[%c0_15, %c0_16] : memref<8x256xf32, #tpu.memory_space<vmem>>, vector<8x256xf32>
    tpu.vector_store %arg8[%c0_15, %c0_16], %32 {strides = array<i32>} : memref<8x256xf32, #tpu.memory_space<vmem>>, vector<8x256xf32>,
    %c0_i32_17 = arith.constant 0 : i32
    %34 = arith.cmpi eq, %arg1, %c0_i32_17 : i32
    %c0_i32_18 = arith.constant 0 : i32
    %35 = arith.cmpi eq, %arg2, %c0_i32_18 : i32
    %36 = arith.andi %34, %35 : i1
    %37 = arith.extui %36 : i1 to i32
    %c0_i32_19 = arith.constant 0 : i32
    %38 = arith.cmpi ne, %37, %c0_i32_19 : i32
    scf.if %38 {
      %c0_20 = arith.constant 0 : index
      %c0_21 = arith.constant 0 : index
      %39 = vector.load %arg8[%c0_20, %c0_21] : memref<8x256xf32, #tpu.memory_space<vmem>>, vector<8x256xf32>
      %40 = vector.shape_cast %39 : vector<8x256xf32> to vector<1x8x256xf32>
      %cst_22 = arith.constant dense<0.000000e+00> : vector<1xf32>
      %41 = vector.multi_reduction <add>, %40, %cst_22 [1, 2] : vector<1x8x256xf32> to vector<1xf32>
      %42 = vector.shape_cast %41 : vector<1xf32> to vector<1x1x1xf32>
      %43 = vector.extract %42[0, 0, 0] : f32 from vector<1x1x1xf32>
      %c0_23 = arith.constant 0 : index
      %c0_24 = arith.constant 0 : index
      %44 = memref.load %arg7[%c0_23, %c0_24] : memref<1x1xf32, #tpu.memory_space<smem>>
      memref.store %43, %arg7[%c0_23, %c0_24] : memref<1x1xf32, #tpu.memory_space<smem>>
    } else {
    }
    return
  }
  func.func @transform_0(%arg0: i32, %arg1: i32, %arg2: i32) -> (i32, i32) {
    %c0_i32 = arith.constant 0 : i32
    return %arg1, %arg2 : i32, i32
  }
  func.func @transform_1(%arg0: i32, %arg1: i32, %arg2: i32) -> (i32, i32) {
    %c0_i32 = arith.constant 0 : i32
    return %arg1, %arg2 : i32, i32
  }
  func.func @transform_2(%arg0: i32, %arg1: i32, %arg2: i32) -> (i32, i32) {
    %c0_i32 = arith.constant 0 : i32
    %c0_i32_0 = arith.constant 0 : i32
    return %arg1, %c0_i32 : i32, i32
  }
  func.func @transform_3(%arg0: i32, %arg1: i32, %arg2: i32) -> (i32, i32) {
    %c0_i32 = arith.constant 0 : i32
    %c0_i32_0 = arith.constant 0 : i32
    return %arg1, %c0_i32 : i32, i32
  }
  func.func @transform_4(%arg0: i32, %arg1: i32, %arg2: i32) -> (i32, i32) {
    %c0_i32 = arith.constant 0 : i32
    %c0_i32_0 = arith.constant 0 : i32
    return %arg0, %c0_i32 : i32, i32
  }
}

</mosaic_0001>

<llo_original>
// kernel: bce_with_logits_loss.1
$region0: #{bce_with_logits_loss.1}
  #allocation0 [shape = 'u32[]', space=smem, size = 0x4, offset = 0x4, fixed_abs, tag = 'smem constant byte address 0x4 - core index']
  #allocation1 [shape = 'u32[144,128]{1,0:T(1,128)}', space=vmem, size = 0x12000, scoped, tag = 'internal scratch']
  #allocation2 [shape = 'f32[8,256]{1,0:T(8,128)}', space=vmem, size = 0x2000, scoped, tag = 'scratch operand']
  %s0 = inlined_call_operand.vmem [shape: f32[8,256], index: 0, kind: input, shape index: {}]
  %s1 = inlined_call_operand.vmem [shape: f32[8,256], index: 1, kind: input, shape index: {}]
  %s2 = inlined_call_operand.vmem [shape: f32[8,1], index: 2, kind: input, shape index: {}]
  %s3 = inlined_call_operand.vmem [shape: f32[8,1], index: 3, kind: input, shape index: {}]
  %s4 = inlined_call_operand.hbm [shape: f32[1,1], index: 4, kind: output, shape index: {}]
  %s5 = sld [smem:[#allocation0]]
  $region34: #{bce_with_logits_loss.1} parent=0
    _
  %s7 = ssub.s32 1, %s5
  %s8 = scalar_select 0, %s7, %s5
  $region1: #{bce_with_logits_loss.1} parent=0
    #allocation3 [shape = 'u8[512]{0}', space=smem, size = 0x200, scoped, tag = 'output window, operand 0, single buffered']
    #allocation4 [shape = 's32[1]{0}', space=sflag, size = 0x4, scoped, tag = 'scoped memory for bce_with_logits_loss.1']
    %9 = vsyncpa [#allocation4], 0
    // Predicated region
    $region2: #{bce_with_logits_loss.1} parent=1 // pred_check
      _
    $region3: #{bce_with_logits_loss.1} parent=1 // pred_check_branch
      %11 = sbr.rel (0) target = $region5
    $region4: #{bce_with_logits_loss.1} parent=1 // pred_region
      _
    $region5: #{bce_with_logits_loss.1} parent=1 // pred_fallthru
      _
    // Predicated region
    $region6: #{bce_with_logits_loss.1} parent=1 // pred_check
      _
    $region7: #{bce_with_logits_loss.1} parent=1 // pred_check_branch
      %13 = sbr.rel (0) target = $region9
    $region8: #{bce_with_logits_loss.1} parent=1 // pred_region
      _
    $region9: #{bce_with_logits_loss.1} parent=1 // pred_fallthru
      _
    // Predicated region
    $region10: #{bce_with_logits_loss.1} parent=1 // pred_check
      _
    $region11: #{bce_with_logits_loss.1} parent=1 // pred_check_branch
      %15 = sbr.rel (0) target = $region13
    $region12: #{bce_with_logits_loss.1} parent=1 // pred_region
      _
    $region13: #{bce_with_logits_loss.1} parent=1 // pred_fallthru
      _
    // Predicated region
    $region14: #{bce_with_logits_loss.1} parent=1 // pred_check
      _
    $region15: #{bce_with_logits_loss.1} parent=1 // pred_check_branch
      %17 = sbr.rel (0) target = $region17
    $region16: #{bce_with_logits_loss.1} parent=1 // pred_region
      _
    $region17: #{bce_with_logits_loss.1} parent=1 // pred_fallthru
      _
    %p18 = scmp.eq.s32.totalorder 0, 0
    %p19 = scmp.eq.s32.totalorder 0, 0
    %p20 = pnand %p18, %p19
    %p21 = pneg %p20
    // Predicated region
    $region18: #{bce_with_logits_loss.1} parent=1 // pred_check
      _
    $region19: #{bce_with_logits_loss.1} parent=1 // pred_check_branch
      %23 = sbr.rel (%p20) target = $region21
    $region20: #{bce_with_logits_loss.1} parent=1 // pred_region
      %24 = vst [vmem:[#allocation2] sm:$0xff] 0.0
      %25 = vst [vmem:[#allocation2 + $0x8] sm:$0xff] 0.0
    $region21: #{bce_with_logits_loss.1} parent=1 // pred_fallthru
      _
    %v26 = vld [vmem:[%s0] sm:$0xff]
    %v27 = vld [vmem:[%s0 + $0x8] sm:$0xff]
    %v28 = vld [vmem:[%s1] sm:$0xff]
    %v29 = vld [vmem:[%s1 + $0x8] sm:$0xff]
    %v30 = vld [vmem:[%s2] sm:$0xff]
    %v31 = vld [vmem:[%s3] sm:$0xff]
    %v32 = vsub.f32 0.0, %v26
    %v33 = vsub.f32 0.0, %v27
    %v34 = vmax.f32 %v32, 0.0
    %v35 = vmax.f32 %v33, 0.0
    %v36 = vand.u32 2147483647, %v26
    %v37 = vand.u32 2147483647, %v27
    %v38 = vsub.f32 0.0, %v36
    %v39 = vsub.f32 0.0, %v37
    %v40 = vmul.f32 %v38, 1.442695
    %v41 = vpow.pop %v40
    %v42 = vmul.f32 %v39, 1.442695
    %v43 = vpow.pop %v42
    %v44 = vadd.f32 %v41, 1.0
    %v45 = vlog2.pop %v44
    %v46 = vmul.f32 %v45, 0.6931472
    %v47 = vmul.f32 -0.5, %v41
    %v48 = vadd.f32 %v47, 1.0
    %v49 = vmul.f32 %v48, %v41
    %v50 = vand.u32 2147483647, %v41
    %vm51 = vcmp.lt.f32.partialorder %v50, 0.0004427343
    %v52 = vsel %vm51, %v49, %v46
    %v53 = vadd.f32 %v43, 1.0
    %v54 = vlog2.pop %v53
    %v55 = vmul.f32 %v54, 0.6931472
    %v56 = vmul.f32 -0.5, %v43
    %v57 = vadd.f32 %v56, 1.0
    %v58 = vmul.f32 %v57, %v43
    %v59 = vand.u32 2147483647, %v43
    %vm60 = vcmp.lt.f32.partialorder %v59, 0.0004427343
    %v61 = vsel %vm60, %v58, %v55
    %v62 = vadd.f32 %v34, %v52
    %v63 = vadd.f32 %v35, %v61
    %v64 = vsub.f32 1.0, %v28
    %v65 = vsub.f32 1.0, %v29
    %v66 = vmul.f32 %v64, %v26
    %v67 = vmul.f32 %v65, %v27
    %69 = vset.pattern.permute.xlu0 0
    %70 = vperm.xlu0 %69, %v31
    %v71 = vpop.permute.xlu0 %70
    %v73 = vmul.f32 %v71, %v28
    %v74 = vmul.f32 %v71, %v29
    %v75 = vadd.f32 %v73, %v64
    %v76 = vadd.f32 %v74, %v65
    %v77 = vmul.f32 %v75, %v62
    %v78 = vmul.f32 %v76, %v63
    %v79 = vadd.f32 %v66, %v77
    %v80 = vadd.f32 %v67, %v78
    %82 = vset.pattern.permute.xlu0 0
    %83 = vperm.xlu0 %82, %v30
    %v84 = vpop.permute.xlu0 %83
    %v86 = vmul.f32 %v79, %v84
    %v87 = vmul.f32 %v80, %v84
    %v88 = vld [vmem:[#allocation2] sm:$0xff]
    %v89 = vld [vmem:[#allocation2 + $0x8] sm:$0xff]
    %v90 = vadd.f32 %v88, %v86
    %v91 = vadd.f32 %v89, %v87
    %92 = vst [vmem:[#allocation2] sm:$0xff] %v90
    %93 = vst [vmem:[#allocation2 + $0x8] sm:$0xff] %v91
    // Predicated region
    $region22: #{bce_with_logits_loss.1} parent=1 // pred_check
      _
    $region23: #{bce_with_logits_loss.1} parent=1 // pred_check_branch
      %95 = sbr.rel (%p20) target = $region25
    $region24: #{bce_with_logits_loss.1} parent=1 // pred_region
      %v96 = vld [vmem:[#allocation2] sm:$0xff]
      %v97 = vld [vmem:[#allocation2 + $0x8] sm:$0xff]
      %v98 = vadd.f32 %v96, %v97
      %99 = vadd.xlane.f32.xlu0 %v98
      %v100 = vpop.xlane.xlu0 %99
      %v101 = vrot.slane %v100, 4
      %v102 = vadd.f32 %v100, %v101
      %v103 = vrot.slane %v102, 2
      %v104 = vadd.f32 %v102, %v103
      %v105 = vrot.slane %v104, 1
      %v106 = vadd.f32 %v104, %v105
      %s107 = vtos %v106
      %s108 = scalar_lea.smem [#allocation3], 0
      %109 = sst [smem:[%s108]] %s107
    $region25: #{bce_with_logits_loss.1} parent=1 // pred_fallthru
      _
    // Predicated region
    $region26: #{bce_with_logits_loss.1} parent=1 // pred_check
      _
    $region27: #{bce_with_logits_loss.1} parent=1 // pred_check_branch
      %111 = sbr.rel (0) target = $region29
    $region28: #{bce_with_logits_loss.1} parent=1 // pred_region
      %s113 = ssub.s32 16, 16
      %114 = vsyncadd [#allocation4], %s113
      %117 = dma.smem_to_hbm [#allocation3], 16, %s4, [#allocation4]
    $region29: #{bce_with_logits_loss.1} parent=1 // pred_fallthru
      _
    // Predicated region
    $region30: #{bce_with_logits_loss.1} parent=1 // pred_check
      _
    $region31: #{bce_with_logits_loss.1} parent=1 // pred_check_branch
      %119 = sbr.rel (0) target = $region33
    $region32: #{bce_with_logits_loss.1} parent=1 // pred_region
      %120 = dma.done [#allocation4], 16
    $region33: #{bce_with_logits_loss.1} parent=1 // pred_fallthru
      _
    %121 = sfence
    %122 = vsyncpa [#allocation4], 1

</llo_original>
